<compile_context>
chip_gen: v5e
topology: v5e:2x2
jax: 0.10.0
libtpu: 0.0.40
codegen_flags: <defaults>
</compile_context>

<pallas_src>
import numpy as np
import jax
import jax.numpy as jnp
from jax import lax
from jax.experimental import pallas as pl
from jax.experimental.pallas import tpu as pltpu

F32 = jnp.float32
BF16 = jnp.bfloat16


# --------------------------------------------------------------------------- #
# Kernel 1: coarse attention path, one fused MXU dot per grid step.
#   [theta+phi] = [wt|wp] @ [x_taps; g]   (Ci, K4+Cg) x (K4+Cg, Tc), B folded into N
#   f   = relu(. + (bt+bp))
#   psi = sum_Ci(f * wpsi) + bpsi         (VPU/XLU sublane reduction, no N=1 matmul)
#   sig = sigmoid(psi)                    -> (1, Tc) lane-dense coarse map
# --------------------------------------------------------------------------- #
def coarse_attention_kernel(xsg_ref, wcat_ref, bcat_ref, wpsi_ref, bpsi_ref, sig_ref):
    wcat = wcat_ref[...]                                   # (Ci, K4+Cg) bf16
    bcat = bcat_ref[...]                                   # (Ci, 1)     f32
    wpsi = wpsi_ref[...]                                   # (Ci, 1)     f32
    bpsi = bpsi_ref[...]                                   # (1, 1)      f32
    f = jnp.dot(wcat, xsg_ref[...], preferred_element_type=F32) + bcat   # (Ci, Tc)
    f = jnp.maximum(f, 0.0)                                # relu, f32
    psi = jnp.sum(f * wpsi, axis=0, keepdims=True) + bpsi  # (1, Tc)
    sig_ref[...] = jax.nn.sigmoid(psi)


# --------------------------------------------------------------------------- #
# Kernel 2: separable bilinear upsample (Hs,Ws) -> (H,W), align_corners=False.
# Tiny: runs un-gridded, fully VMEM resident (linear in HW, no HW^2 operator).
# --------------------------------------------------------------------------- #
def bilinear_upsample_kernel(sig_c_ref, uph_ref, upwt_ref, out_ref):
    B = sig_c_ref.shape[0]
    uph = uph_ref[...]                                     # (H, Hs)
    upwt = upwt_ref[...]                                   # (Ws, W)
    for b in range(B):
        t = jnp.dot(sig_c_ref[b], upwt, preferred_element_type=F32)      # (Hs, W)
        out_ref[b] = jnp.dot(uph, t, preferred_element_type=F32)         # (H, W)


# --------------------------------------------------------------------------- #
# Kernel 3 (fine pass 1): per-(tile, batch) shifted BN statistics of
# wy = W(sig*x)+bw: per-channel sum and CENTERED sum of squares (shift = chunk
# mean). Combined in the wrapper with Chan's parallel formula -> exact global
# batch statistics without E[x^2]-mean^2 cancellation.
# --------------------------------------------------------------------------- #
def fine_stats_kernel(x_ref, sig_ref, ww_ref, bw_ref, stats_ref):
    B, Cin, Tf = x_ref.shape
    ww = ww_ref[...]                                       # (Cin, Cin) bf16
    bw = bw_ref[...]                                       # (Cin, 1)   f32
    sig = sig_ref[...]                                     # (B, Tf)    f32
    inv_n = 1.0 / Tf
    rows = []
    for b in range(B):
        y = x_ref[b].astype(F32) * sig[b][None, :]                          # (Cin, Tf) f32
        wy = jnp.dot(ww, y.astype(BF16), preferred_element_type=F32) + bw   # (Cin, Tf)
        s1 = jnp.sum(wy, axis=1)                                            # (Cin,)
        d = wy - (s1 * inv_n)[:, None]                                      # shifted
        m2 = jnp.sum(d * d, axis=1)                                         # (Cin,)
        rows.append(s1[None, :])
        rows.append(m2[None, :])
    stats_ref[0, :, :] = jnp.concatenate(rows, axis=0)                      # (2*B, Cin)


# --------------------------------------------------------------------------- #
# Kernel 4 (fine pass 2): gating multiply + W 1x1 conv + global BN affine.
# --------------------------------------------------------------------------- #
def fine_apply_kernel(x_ref, sig_ref, ww_ref, bw_ref, scale_ref, shift_ref, out_ref):
    B = x_ref.shape[0]
    ww = ww_ref[...]                                       # (Cin, Cin) bf16
    bw = bw_ref[...]                                       # (Cin, 1)   f32
    scale = scale_ref[...]                                 # (Cin, 1)   gamma / sqrt(var+eps)
    shift = shift_ref[...]                                 # (Cin, 1)   beta - mean*scale
    sig = sig_ref[...]                                     # (B, Tf)
    for b in range(B):
        y = x_ref[b].astype(F32) * sig[b][None, :]
        wy = jnp.dot(ww, y.astype(BF16), preferred_element_type=F32) + bw
        out_ref[b] = (wy * scale + shift).astype(out_ref.dtype)


# ------------------------------- wrapper helpers ----------------------------- #
def _bilinear_matrix(out_size: int, in_size: int, align_corners: bool = False) -> np.ndarray:
    """1-D bilinear interpolation matrix.

    Default align_corners=False matches F.upsample/F.interpolate(mode='bilinear')
    in PyTorch >= 0.4.1 (pre-0.4 semantics were align_corners=True; flip the flag
    if parity with those versions is needed)."""
    M = np.zeros((out_size, in_size), dtype=np.float32)
    for i in range(out_size):
        if align_corners and out_size > 1:
            src = i * (in_size - 1) / (out_size - 1)
        else:
            src = max((i + 0.5) * (in_size / out_size) - 0.5, 0.0)
        i0 = int(np.floor(src))
        frac = src - i0
        i0c = min(max(i0, 0), in_size - 1)
        i1c = min(i0 + 1, in_size - 1)
        M[i, i0c] += 1.0 - frac
        M[i, i1c] += frac
    return M


def _hw_budget():
    """(per-grid-step streamed-bytes target, scoped-VMEM limit) per TPU generation."""
    kind = ""
    try:
        kind = jax.devices()[0].device_kind.lower()
    except Exception:
        pass
    if "v7" in kind or "7x" in kind:
        # v7x: 64 MiB physical VMEM per TensorCore -> cap tiles and scoped VMEM
        return 4 * 1024 * 1024, 44 * 1024 * 1024
    # v5e / v6e: 128 MiB physical VMEM, HBM-bound -> big tiles, raised scoped limit
    return 8 * 1024 * 1024, 80 * 1024 * 1024


def _pick_tile(n: int, bytes_per_col: int, target_bytes: int, min_tiles: int = 2) -> int:
    """Lane-tile selection dividing n.

    Preference: largest multiple of 128 under the byte target that still gives
    >= min_tiles grid steps (so the 'parallel' grid shards across v7x's two TCs),
    then any 128-multiple under the target, then any divisor under the target."""
    cands = [t for t in range(128, n + 1, 128)
             if n % t == 0 and t * bytes_per_col <= target_bytes]
    good = [t for t in cands if n // t >= min_tiles]
    if good:
        return max(good)
    if cands:
        return max(cands)
    divs = [d for d in range(1, n + 1)
            if n % d == 0 and d * bytes_per_col <= target_bytes]
    if divs:
        return max(divs)
    # TODO(synk): shapes whose flattened spatial size has no divisor under the VMEM
    # budget would need a pl.cdiv grid with a masked last tile; not required here.
    return n


# ------------------------------------ wrapper -------------------------------- #
def grid_attention_block(x, g, params, out_dtype=jnp.float32):
    """x: (B, Cin, H, W) NCHW;  g: (B, Cg, Hs, Ws) NCHW.  Returns (W_y, sigm_psi_f)."""
    B, Cin, H, W = x.shape
    Bg, Cg, Hg, Wg = g.shape
    assert B == Bg
    kh, kw = 2, 2                                   # sub_sample_factor = (2, 2)
    assert H % kh == 0 and W % kw == 0
    Hs, Ws = H // kh, W // kw
    assert (Hg, Wg) == (Hs, Ws), "gating signal must be at the sub-sampled resolution"
    P, HW = Hs * Ws, H * W
    Ci = params['wt4'].shape[0]
    K4 = kh * kw * Cin
    Kc = K4 + Cg

    target_bytes, vmem_limit = _hw_budget()

    # Single bf16 view of x, shared by the coarse tap-gather and the fine stream
    # (no up-front f32 copy of x).
    x_bf = x.astype(BF16)

    # Coarse operand: [2x2-conv taps of x ; g] stacked along the contraction axis,
    # with B folded into the lane (N) dimension -> one (Ci, Kc) x (Kc, B*P) stream.
    x6 = x_bf.reshape(B, Cin, Hs, kh, Ws, kw)
    taps = jnp.stack([x6[:, :, :, i, :, j] for i in range(kh) for j in range(kw)],
                     axis=0)                                        # (4, B, Cin, Hs, Ws)
    taps = jnp.transpose(taps, (0, 2, 1, 3, 4)).reshape(K4, B * P)  # tap-major, ch minor
    g_r = jnp.transpose(g.astype(BF16), (1, 0, 2, 3)).reshape(Cg, B * P)
    xsg = jnp.concatenate([taps, g_r], axis=0)                      # (Kc, B*P) bf16

    # Fused theta/phi weights and bias.
    wcat = jnp.concatenate([params['wt4'], params['wp']], axis=1).astype(BF16)  # (Ci, Kc)
    bcat = (params['bt'] + params['bp']).astype(F32)                            # (Ci, 1)
    wpsi = params['wpsi'].astype(F32)
    bpsi = params['bpsi'].astype(F32)
    ww = params['ww'].astype(BF16)
    bw = params['bw'].astype(F32)

    # ---------------- kernel 1: fused coarse attention -> coarse sigmoid map -----
    Tc = _pick_tile(B * P, Kc * 2 + 4, target_bytes)
    n_ct = (B * P) // Tc
    sig_c = pl.pallas_call(
        coarse_attention_kernel,
        out_shape=jax.ShapeDtypeStruct((1, B * P), F32),
        grid=(n_ct,),
        in_specs=[
            pl.BlockSpec((Kc, Tc), lambda i: (0, i)),
            pl.BlockSpec((Ci, Kc), lambda i: (0, 0)),
            pl.BlockSpec((Ci, 1), lambda i: (0, 0)),
            pl.BlockSpec((Ci, 1), lambda i: (0, 0)),
            pl.BlockSpec((1, 1), lambda i: (0, 0)),
        ],
        out_specs=pl.BlockSpec((1, Tc), lambda i: (0, i)),
        compiler_params=pltpu.CompilerParams(
            dimension_semantics=("parallel",), vmem_limit_bytes=vmem_limit),
    )(xsg, wcat, bcat, wpsi, bpsi)

    # ---------------- kernel 2: separable bilinear upsample ----------------------
    uph = jnp.asarray(_bilinear_matrix(H, Hs))                      # (H, Hs)
    upwt = jnp.asarray(_bilinear_matrix(W, Ws).T)                   # (Ws, W)
    sig_up = pl.pallas_call(
        bilinear_upsample_kernel,
        out_shape=jax.ShapeDtypeStruct((B, H, W), F32),
        in_specs=[pl.BlockSpec(memory_space=pltpu.MemorySpace.VMEM)] * 3,
        out_specs=pl.BlockSpec(memory_space=pltpu.MemorySpace.VMEM),
    )(sig_c.reshape(B, Hs, Ws), uph, upwt)

    # ---------------- fine path: gating * x, W 1x1 conv, BatchNorm ---------------
    x_f = x_bf.reshape(B, Cin, HW)                   # bf16 stream (free reshape)
    sig_f = sig_up.reshape(B, HW)                    # f32, lane-dense attention map
    out_bytes = jnp.dtype(out_dtype).itemsize
    Tf = _pick_tile(HW, B * (Cin * 2 + 4 + Cin * out_bytes), target_bytes)
    n_ft = HW // Tf

    fine_in_specs = [
        pl.BlockSpec((B, Cin, Tf), lambda i: (0, 0, i)),
        pl.BlockSpec((B, Tf), lambda i: (0, i)),
        pl.BlockSpec((Cin, Cin), lambda i: (0, 0)),
        pl.BlockSpec((Cin, 1), lambda i: (0, 0)),
    ]
    fine_cp = pltpu.CompilerParams(dimension_semantics=("parallel",),
                                   vmem_limit_bytes=vmem_limit)

    # pass 1: per-(tile, batch) shifted partial statistics
    stats = pl.pallas_call(
        fine_stats_kernel,
        out_shape=jax.ShapeDtypeStruct((n_ft, 2 * B, Cin), F32),
        grid=(n_ft,),
        in_specs=fine_in_specs,
        out_specs=pl.BlockSpec((1, 2 * B, Cin), lambda i: (i, 0, 0)),
        compiler_params=fine_cp,
    )(x_f, sig_f, ww, bw)

    # Chan-style combination of per-chunk stats -> exact global batch statistics.
    cnt = float(Tf)                                  # elements per chunk per channel
    N = float(B * HW)
    stats_r = stats.reshape(n_ft, B, 2, Cin)
    s1 = stats_r[:, :, 0, :].reshape(-1, Cin)        # (n_ft*B, Cin) chunk sums
    m2 = stats_r[:, :, 1, :].reshape(-1, Cin)        # (n_ft*B, Cin) centered SSQ
    mean = jnp.sum(s1, axis=0) / N
    cmean = s1 / cnt
    var = (jnp.sum(m2, axis=0) + cnt * jnp.sum((cmean - mean[None, :]) ** 2, axis=0)) / N
    var = jnp.maximum(var, 0.0)                      # biased variance (training-mode BN)
    inv = params['gamma'].astype(F32) * lax.rsqrt(var + 1e-5)
    scale = inv.reshape(Cin, 1)
    shift = (params['beta'].astype(F32) - mean * inv).reshape(Cin, 1)

    # pass 2: recompute wy per tile (cheaper than an HBM round trip) + BN affine
    wy = pl.pallas_call(
        fine_apply_kernel,
        out_shape=jax.ShapeDtypeStruct((B, Cin, HW), out_dtype),
        grid=(n_ft,),
        in_specs=fine_in_specs + [
            pl.BlockSpec((Cin, 1), lambda i: (0, 0)),
            pl.BlockSpec((Cin, 1), lambda i: (0, 0)),
        ],
        out_specs=pl.BlockSpec((B, Cin, Tf), lambda i: (0, 0, i)),
        compiler_params=fine_cp,
    )(x_f, sig_f, ww, bw, scale, shift)

    W_y = wy.reshape(B, Cin, H, W)                   # free reshapes back to NCHW
    sigm_psi_f = sig_up.reshape(B, 1, H, W)
    return W_y, sigm_psi_f


# ------------------------- deterministic parameters -------------------------- #
def make_params(key, in_channels, gating_channels, inter_channels, k=(2, 2)):
    Cin, Cg, Ci = in_channels, gating_channels, inter_channels
    kh, kw = k
    ks = jax.random.split(key, 8)

    def kaiming(kk, shape, fan_in):
        return jax.random.normal(kk, shape, F32) * np.sqrt(2.0 / fan_in)

    # PyTorch conv layout (out, in, kh, kw) rearranged for the kernel layouts
    theta_w = kaiming(ks[0], (Ci, Cin, kh, kw), Cin * kh * kw)
    wt4 = jnp.transpose(theta_w, (0, 2, 3, 1)).reshape(Ci, kh * kw * Cin)   # tap-major
    bt = jax.random.normal(ks[1], (Ci, 1), F32) * 0.01

    phi_w = kaiming(ks[2], (Ci, Cg, 1, 1), Cg)
    wp = phi_w[:, :, 0, 0]                                                  # (Ci, Cg)
    bp = jax.random.normal(ks[3], (Ci, 1), F32) * 0.01

    psi_w = kaiming(ks[4], (1, Ci, 1, 1), Ci)
    wpsi = psi_w[0, :, 0, 0].reshape(Ci, 1)                                 # (Ci, 1)
    bpsi = jnp.zeros((1, 1), F32)

    W_w = kaiming(ks[5], (Cin, Cin, 1, 1), Cin)
    ww = W_w[:, :, 0, 0]                                                    # (Cout, Cin)
    bw = jnp.zeros((Cin, 1), F32)

    gamma = 1.0 + 0.02 * jax.random.normal(ks[6], (Cin,), F32)              # BN weight ~ N(1,.02)
    beta = jnp.zeros((Cin,), F32)                                           # BN bias = 0

    return dict(wt4=wt4, bt=bt, wp=wp, bp=bp, wpsi=wpsi, bpsi=bpsi,
                ww=ww, bw=bw, gamma=gamma, beta=beta)


if __name__ == "__main__":
    B, Cin, H, W = 2, 4, 16, 16
    Cg = 8
    Ci = max(Cin // 2, 1)              # inter_channels default = in_channels // 2
    Hs, Ws = H // 2, W // 2

    key = jax.random.PRNGKey(0)
    kx, kg, kp = jax.random.split(key, 3)
    x = jax.random.normal(kx, (B, Cin, H, W), F32)
    g = jax.random.normal(kg, (B, Cg, Hs, Ws), F32)
    params = make_params(kp, Cin, Cg, Ci)

    W_y, sigm_psi_f = grid_attention_block(x, g, params)
    jax.block_until_ready((W_y, sigm_psi_f))

    assert W_y.shape == (B, Cin, H, W)
    assert sigm_psi_f.shape == (B, 1, H, W)
    assert bool(jnp.all(jnp.isfinite(W_y))) and bool(jnp.all(jnp.isfinite(sigm_psi_f)))
    print("KERNEL_OK")
</pallas_src>

<mosaic_0001>
module attributes {stable_mosaic.version = 11 : i64} {
  func.func @coarse_attention_kernel(%arg0: i32, %arg1: memref<24x128xbf16, #tpu.memory_space<vmem>>, %arg2: memref<2x24xbf16, #tpu.memory_space<vmem>>, %arg3: memref<2x1xf32, #tpu.memory_space<vmem>>, %arg4: memref<2x1xf32, #tpu.memory_space<vmem>>, %arg5: memref<1x1xf32, #tpu.memory_space<vmem>>, %arg6: memref<1x128xf32, #tpu.memory_space<vmem>>) attributes {dimension_semantics = [#tpu.dimension_semantics<parallel>], iteration_bounds = array<i64: 1>, scalar_prefetch = 0 : i64, scratch_operands = 0 : i64, tpu.core_type = #tpu.core_type<tc>, window_params = [{transform_indices = @transform_0, window_bounds = array<i64: 24, 128>}, {pipeline_mode = #tpu.pipeline_mode<synchronous>, transform_indices = @transform_1, window_bounds = array<i64: 2, 24>}, {pipeline_mode = #tpu.pipeline_mode<synchronous>, transform_indices = @transform_2, window_bounds = array<i64: 2, 1>}, {pipeline_mode = #tpu.pipeline_mode<synchronous>, transform_indices = @transform_3, window_bounds = array<i64: 2, 1>}, {pipeline_mode = #tpu.pipeline_mode<synchronous>, transform_indices = @transform_4, window_bounds = array<i64: 1, 1>}, {transform_indices = @transform_5, window_bounds = array<i64: 1, 128>}]} {
    %c0 = arith.constant 0 : index
    %c0_0 = arith.constant 0 : index
    %0 = vector.load %arg2[%c0, %c0_0] : memref<2x24xbf16, #tpu.memory_space<vmem>>, vector<2x24xbf16>
    %c0_1 = arith.constant 0 : index
    %c0_2 = arith.constant 0 : index
    %1 = vector.load %arg3[%c0_1, %c0_2] : memref<2x1xf32, #tpu.memory_space<vmem>>, vector<2x1xf32>
    %c0_3 = arith.constant 0 : index
    %c0_4 = arith.constant 0 : index
    %2 = vector.load %arg4[%c0_3, %c0_4] : memref<2x1xf32, #tpu.memory_space<vmem>>, vector<2x1xf32>
    %c0_5 = arith.constant 0 : index
    %c0_6 = arith.constant 0 : index
    %3 = vector.load %arg5[%c0_5, %c0_6] : memref<1x1xf32, #tpu.memory_space<vmem>>, vector<1x1xf32>
    %c0_7 = arith.constant 0 : index
    %c0_8 = arith.constant 0 : index
    %4 = vector.load %arg1[%c0_7, %c0_8] : memref<24x128xbf16, #tpu.memory_space<vmem>>, vector<24x128xbf16>
    %cst = arith.constant dense<0.000000e+00> : vector<2x128xf32>
    %5 = tpu.matmul %0, %4, %cst {dimension_numbers = #tpu.dot_dimension_numbers<[1], [0], [0], [1], [0, 0, 1, 1], [], []>} : vector<2x24xbf16>, vector<24x128xbf16>, vector<2x128xf32> -> vector<2x128xf32>
    %6 = vector.broadcast %1 : vector<2x1xf32> to vector<2x128xf32>
    %7 = arith.addf %5, %6 : vector<2x128xf32>
    %cst_9 = arith.constant 0.000000e+00 : f32
    %8 = vector.broadcast %cst_9 : f32 to vector<2x128xf32>
    %9 = arith.maximumf %7, %8 : vector<2x128xf32>
    %10 = vector.broadcast %2 : vector<2x1xf32> to vector<2x128xf32>
    %11 = arith.mulf %9, %10 : vector<2x128xf32>
    %cst_10 = arith.constant dense<0.000000e+00> : vector<128xf32>
    %12 = vector.multi_reduction <add>, %11, %cst_10 [0] : vector<2x128xf32> to vector<128xf32>
    %13 = vector.shape_cast %12 : vector<128xf32> to vector<1x128xf32>
    %14 = vector.broadcast %3 : vector<1x1xf32> to vector<1x128xf32>
    %15 = arith.addf %13, %14 : vector<1x128xf32>
    %16 = arith.negf %15 : vector<1x128xf32>
    %17 = math.exp %16 : vector<1x128xf32>
    %cst_11 = arith.constant 1.000000e+00 : f32
    %18 = vector.broadcast %cst_11 : f32 to vector<1x128xf32>
    %19 = arith.addf %18, %17 : vector<1x128xf32>
    %20 = arith.divf %18, %19 : vector<1x128xf32>
    %c0_12 = arith.constant 0 : index
    %c0_13 = arith.constant 0 : index
    %21 = vector.load %arg6[%c0_12, %c0_13] : memref<1x128xf32, #tpu.memory_space<vmem>>, vector<1x128xf32>
    tpu.vector_store %arg6[%c0_12, %c0_13], %20 {strides = array<i32>} : memref<1x128xf32, #tpu.memory_space<vmem>>, vector<1x128xf32>,
    return
  }
  func.func @transform_0(%arg0: i32) -> (i32, i32) {
    %c0_i32 = arith.constant 0 : i32
    %c0_i32_0 = arith.constant 0 : i32
    return %c0_i32, %arg0 : i32, i32
  }
  func.func @transform_1(%arg0: i32) -> (i32, i32) {
    %c0_i32 = arith.constant 0 : i32
    %c0_i32_0 = arith.constant 0 : i32
    %c0_i32_1 = arith.constant 0 : i32
    return %c0_i32, %c0_i32_0 : i32, i32
  }
  func.func @transform_2(%arg0: i32) -> (i32, i32) {
    %c0_i32 = arith.constant 0 : i32
    %c0_i32_0 = arith.constant 0 : i32
    %c0_i32_1 = arith.constant 0 : i32
    return %c0_i32, %c0_i32_0 : i32, i32
  }
  func.func @transform_3(%arg0: i32) -> (i32, i32) {
    %c0_i32 = arith.constant 0 : i32
    %c0_i32_0 = arith.constant 0 : i32
    %c0_i32_1 = arith.constant 0 : i32
    return %c0_i32, %c0_i32_0 : i32, i32
  }
  func.func @transform_4(%arg0: i32) -> (i32, i32) {
    %c0_i32 = arith.constant 0 : i32
    %c0_i32_0 = arith.constant 0 : i32
    %c0_i32_1 = arith.constant 0 : i32
    return %c0_i32, %c0_i32_0 : i32, i32
  }
  func.func @transform_5(%arg0: i32) -> (i32, i32) {
    %c0_i32 = arith.constant 0 : i32
    %c0_i32_0 = arith.constant 0 : i32
    return %c0_i32, %arg0 : i32, i32
  }
}

</mosaic_0001>

<llo_original>
// kernel: tpu_custom_call.1
$region0: #{tpu_custom_call.1}
  #allocation0 [shape = 'u32[]', space=smem, size = 0x4, offset = 0x4, fixed_abs, tag = 'smem constant byte address 0x4 - core index']
  #allocation1 [shape = 'u32[72,128]{1,0:T(1,128)}', space=vmem, size = 0x9000, scoped, tag = 'internal scratch']
  #allocation2 [shape = 'f32[1,1]{1,0:T(1,128)S(1)}', space=vmem, size = 0x200, scoped, tag = 'scoped memory for tpu_custom_call.1']
  %s0 = inlined_call_operand.hbm [shape: bf16[24,128], index: 0, kind: input, shape index: {}]
  %s1 = inlined_call_operand.vmem [shape: bf16[2,24], index: 1, kind: input, shape index: {}]
  %s2 = inlined_call_operand.vmem [shape: f32[2,1], index: 2, kind: input, shape index: {}]
  %s3 = inlined_call_operand.vmem [shape: f32[2,1], index: 3, kind: input, shape index: {}]
  %s4 = inlined_call_operand.<no memory space> [shape: f32[1,1], index: 4, kind: input, shape index: {}]
  %s5 = inlined_call_operand.hbm [shape: f32[1,128], index: 5, kind: output, shape index: {}]
  %s6 = sld [smem:[#allocation0]]
  $region34: #{tpu_custom_call.1} parent=0
    _
  %s8 = ssub.s32 1, %s6
  %s9 = scalar_select 0, %s8, %s6
  %v10 = vstv %s4
  %11 = vst [vmem:[#allocation2] sm:$0x1] %v10
  $region1: #{tpu_custom_call.1} parent=0
    #allocation3 [shape = 'u8[6144]{0}', space=vmem, size = 0x1800, scoped, tag = 'input window, operand 0, single buffered']
    #allocation4 [shape = 's32[1]{0}', space=sflag, size = 0x4, scoped, tag = 'scoped memory for tpu_custom_call.1']
    #allocation5 [shape = 's32[1]{0}', space=sflag, size = 0x4, scoped, tag = 'scoped memory for tpu_custom_call.1']
    #allocation6 [shape = 'u8[512]{0}', space=vmem, size = 0x400, scoped, tag = 'output window, operand 0, single buffered']
    %12 = vsyncpa [#allocation4], 0
    %13 = vsyncpa [#allocation5], 0
    // Predicated region
    $region2: #{tpu_custom_call.1} parent=1 // pred_check
      _
    $region3: #{tpu_custom_call.1} parent=1 // pred_check_branch
      %15 = sbr.rel (0) target = $region5
    $region4: #{tpu_custom_call.1} parent=1 // pred_region
      %17 = vsyncadd [#allocation4], 0
      %s18 = sshll.u32 %s0, 4
      %s19 = int_to_ptr.hbm [resolvable:$true] %s18
      %s20 = sshll.u32 [#allocation3], 4
      %s21 = int_to_ptr.vmem [resolvable:$true] %s20
      %26 = dma.hbm_to_vmem [thread:$0]  %s19, 192, %s21, [#allocation4], 64, 64, 4
    $region5: #{tpu_custom_call.1} parent=1 // pred_fallthru
      _
    // Predicated region
    $region6: #{tpu_custom_call.1} parent=1 // pred_check
      _
    $region7: #{tpu_custom_call.1} parent=1 // pred_check_branch
      %28 = sbr.rel (0) target = $region9
    $region8: #{tpu_custom_call.1} parent=1 // pred_region
      _
    $region9: #{tpu_custom_call.1} parent=1 // pred_fallthru
      _
    // Predicated region
    $region10: #{tpu_custom_call.1} parent=1 // pred_check
      _
    $region11: #{tpu_custom_call.1} parent=1 // pred_check_branch
      %30 = sbr.rel (0) target = $region13
    $region12: #{tpu_custom_call.1} parent=1 // pred_region
      _
    $region13: #{tpu_custom_call.1} parent=1 // pred_fallthru
      _
    // Predicated region
    $region14: #{tpu_custom_call.1} parent=1 // pred_check
      _
    $region15: #{tpu_custom_call.1} parent=1 // pred_check_branch
      %32 = sbr.rel (0) target = $region17
    $region16: #{tpu_custom_call.1} parent=1 // pred_region
      _
    $region17: #{tpu_custom_call.1} parent=1 // pred_fallthru
      _
    // Predicated region
    $region18: #{tpu_custom_call.1} parent=1 // pred_check
      _
    $region19: #{tpu_custom_call.1} parent=1 // pred_check_branch
      %34 = sbr.rel (0) target = $region21
    $region20: #{tpu_custom_call.1} parent=1 // pred_region
      _
    $region21: #{tpu_custom_call.1} parent=1 // pred_fallthru
      _
    // Predicated region
    $region22: #{tpu_custom_call.1} parent=1 // pred_check
      _
    $region23: #{tpu_custom_call.1} parent=1 // pred_check_branch
      %36 = sbr.rel (0) target = $region25
    $region24: #{tpu_custom_call.1} parent=1 // pred_region
      %38 = dma.done [#allocation4], 192
    $region25: #{tpu_custom_call.1} parent=1 // pred_fallthru
      _
    %v40 = vld [vmem:[%s1] sm:$0x1]
    %v41 = vld [vmem:[%s2] sm:$0x3]
    %v42 = vld [vmem:[%s3] sm:$0x3]
    %v43 = vld [vmem:[#allocation2] sm:$0x1]
    %v44 = vld [vmem:[#allocation3] sm:$0xf]
    %v45 = vld [vmem:[#allocation3 + $0x4] sm:$0xf]
    %v46 = vld [vmem:[#allocation3 + $0x8] sm:$0xf]
    %48 = vset.pattern.permute.xlu0 0
    %49 = vperm.xlu0 %48, %v41
    %v50 = vpop.permute.xlu0 %49
    %v55 = vunpack.c.l.b16 %v44
    %v56 = vunpack.c.l.b16 %v45
    %v57 = vunpack.c.l.b16 %v46
    %v58 = vpack.c.b16 %v56, %v55
    %v59 = vpack.c.b16 %v57, %v57
    %vm61 = vcmask 195584
    %v63 = vsel %vm61, %v40, 0
    %vm65 = vcmask 1043456
    %v67 = vsel %vm65, %v59, 0
    %69 = vmatpush.bf16.msra.mxu0 0
    %70 = vmatpush.bf16.msra.mxu0 0
    %71 = vmatpush.bf16.msra.mxu0 0
    %72 = vmatpush.bf16.msra.mxu0 0
    %73 = vmatpush.bf16.msra.mxu0 0
    %74 = vmatpush.bf16.msra.mxu0 0
    %75 = vmatpush.bf16.msra.mxu0 %v67
    %76 = vmatpush.bf16.msra.mxu0 %v58
    %77 = vmatmul.bf16.gmra.mxu0 %v63
    %v78 = vpop.f32.mrf.mxu0
    %v79 = vadd.f32 %v50, %v78
    %v80 = vpop.f32.mrf.mxu0
    %81 = vdwg.mxu0
    %v82 = vmax.f32 %v79, 0.0
    %84 = vset.pattern.permute.xlu0 0
    %85 = vperm.xlu0 %84, %v42
    %v86 = vpop.permute.xlu0 %85
    %v88 = vmul.f32 %v82, %v86
    %vm89 = vcmask 1041408
    %v90 = vsel %vm89, %v88, 0.0
    %v91 = vrot.slane %v90, 4
    %v92 = vadd.f32 %v90, %v91
    %v93 = vrot.slane %v92, 2
    %v94 = vadd.f32 %v92, %v93
    %v95 = vrot.slane %v94, 1
    %v96 = vadd.f32 %v94, %v95
    %98 = vset.pattern.permute.xlu0 0
    %99 = vperm.xlu0 %98, %v43
    %v100 = vpop.permute.xlu0 %99
    %v102 = vperm.slane %v100, 0
    %v103 = vadd.f32 %v96, %v102
    %v104 = vxor.u32 %v103, 2147483648
    %v105 = vmul.f32 %v104, 1.442695
    %v106 = vpow.pop %v105
    %v107 = vadd.f32 %v106, 1.0
    %v108 = vrcp.pop %v107
    %v109 = vmul.f32 %v107, %v108
    %v110 = vsub.f32 1.0, %v109
    %v111 = vmul.f32 %v108, %v110
    %v112 = vadd.f32 %v108, %v111
    %vm113 = vweird.f32 %v107
    %vm114 = vweird.f32 %v108
    %vm115 = vmor %vm113, %vm114
    %v116 = vsel %vm115, %v108, %v112
    %v117 = vand.u32 2147483647, %v107
    %vm118 = vcmp.eq.f32.partialorder %v117, 8.507059e+37
    %v119 = vand.u32 %v107, 2147483648
    %v120 = vor.u32 1.1754944e-38, %v119
    %v121 = vsel %vm118, %v120, %v116
    %v122 = vmul.f32 1.0, %v121
    %123 = vst [vmem:[#allocation6] sm:$0x1] %v122
    // Predicated region
    $region26: #{tpu_custom_call.1} parent=1 // pred_check
      _
    $region27: #{tpu_custom_call.1} parent=1 // pred_check_branch
      %125 = sbr.rel (0) target = $region29
    $region28: #{tpu_custom_call.1} parent=1 // pred_region
      %127 = vsyncadd [#allocation5], 0
      %s129 = sshll.u32 [#allocation6], 4
      %s130 = int_to_ptr.vmem [resolvable:$true] %s129
      %s131 = sshll.u32 %s5, 4
      %s132 = int_to_ptr.hbm [resolvable:$true] %s131
      %134 = dma.vmem_to_hbm [thread:$0]  %s130, 16, %s132, [#allocation5]
    $region29: #{tpu_custom_call.1} parent=1 // pred_fallthru
      _
    // Predicated region
    $region30: #{tpu_custom_call.1} parent=1 // pred_check
      _
    $region31: #{tpu_custom_call.1} parent=1 // pred_check_branch
      %136 = sbr.rel (0) target = $region33
    $region32: #{tpu_custom_call.1} parent=1 // pred_region
      %138 = dma.done [#allocation5], 16
    $region33: #{tpu_custom_call.1} parent=1 // pred_fallthru
      _
    %139 = vsyncpa [#allocation4], 1
    %140 = vsyncpa [#allocation5], 1

</llo_original>
